<compile_context>
chip_gen: v7x
topology: tpu7x:2x2x1
jax: 0.10.0
libtpu: 0.0.40
codegen_flags: <defaults>
</compile_context>

<pallas_src>
import jax
import jax.numpy as jnp
import numpy as np
from jax import lax
from jax.experimental import pallas as pl
from jax.experimental.pallas import tpu as pltpu


def _spectral_mul_kernel(x_ref, w_ref, o_ref):
    """Complex multiply + contract over Cin, elementwise along the mode axis.

    x_ref : (2, Cin, B,     TM)   [0]=real, [1]=imag (Cin on a leading axis)
    w_ref : (2, Cin, TCout, TM)
    o_ref : (2, B,   TCout, TM)
    """
    cin = x_ref.shape[1]
    acc_shape = o_ref.shape[1:]                  # (B, TCout, TM)
    acc_r = jnp.zeros(acc_shape, jnp.float32)
    acc_i = jnp.zeros(acc_shape, jnp.float32)

    # Unrolled accumulation over the (small) in-channel axis: keeps the live
    # set at B*TCout*TM and avoids a (B, Cin, TCout, TM) intermediate.
    # Per-i slices are along leading (untiled) dims -> no sublane extraction.
    for i in range(cin):
        xr = x_ref[0, i][:, None, :]             # (B, 1, TM)
        xi = x_ref[1, i][:, None, :]
        wr = w_ref[0, i][None, :, :]             # (1, TCout, TM)
        wi = w_ref[1, i][None, :, :]
        acc_r = acc_r + (xr * wr - xi * wi)
        acc_i = acc_i + (xr * wi + xi * wr)

    o_ref[0] = acc_r
    o_ref[1] = acc_i


def _pick_tiles(B, Cin, Cout, Mtot, budget_bytes=8 * 1024 * 1024):
    """Pick (TCout, TM) so double-buffered f32 blocks fit the VMEM budget.

    Prefers the largest mode tile first (per-step overhead ~0.35us; bigger
    tiles amortize it and keep stores lane-dense)."""
    def block_bytes(tco, tm):
        per_step = 4 * 2 * (B * Cin * tm + Cin * tco * tm + B * tco * tm)
        return 2 * per_step                      # double buffering

    tm_cands = [c for c in (4096, 2048, 1024, 512, 256, 128) if Mtot % c == 0] \
        or [Mtot]
    tco_cands = [c for c in (256, 128, 64, 32, 16, 8) if Cout % c == 0] or [Cout]

    for tco in tco_cands:
        for tm in tm_cands:
            if block_bytes(tco, tm) <= budget_bytes:
                return tco, tm
    return tco_cands[-1], tm_cands[-1]


def spectral_mul_pallas(x_packed, w_packed):
    """x_packed: (2, Cin, B, Mtot) f32; w_packed: (2, Cin, Cout, Mtot) f32.

    Returns (2, B, Cout, Mtot) f32 with [0]=real, [1]=imag of the complex
    einsum 'bim,iom->bom'.
    """
    _, Cin, B, Mtot = x_packed.shape
    Cout = w_packed.shape[2]
    assert Mtot % 128 == 0, "mode axis must be padded to a multiple of 128"

    tco, tm = _pick_tiles(B, Cin, Cout, Mtot)
    # Mode tiles OUTER, Cout tiles INNER: x block index is constant across the
    # inner axis -> Pallas keeps it resident (x fetched exactly once overall).
    grid = (Mtot // tm, Cout // tco)

    x_spec = pl.BlockSpec((2, Cin, B, tm), lambda mi, co: (0, 0, 0, mi))
    w_spec = pl.BlockSpec((2, Cin, tco, tm), lambda mi, co: (0, 0, co, mi))
    o_spec = pl.BlockSpec((2, B, tco, tm), lambda mi, co: (0, 0, co, mi))

    flops = 8 * B * Cin * Cout * Mtot
    bytes_accessed = 4 * 2 * (B * Cin * Mtot + Cin * Cout * Mtot + B * Cout * Mtot)

    return pl.pallas_call(
        _spectral_mul_kernel,
        out_shape=jax.ShapeDtypeStruct((2, B, Cout, Mtot), jnp.float32),
        grid=grid,
        in_specs=[x_spec, w_spec],
        out_specs=o_spec,
        compiler_params=pltpu.CompilerParams(
            dimension_semantics=("parallel", "parallel"),
            vmem_limit_bytes=32 * 1024 * 1024),
        cost_estimate=pl.CostEstimate(
            flops=flops, transcendentals=0, bytes_accessed=bytes_accessed),
    )(x_packed, w_packed)


class SpectralConv3dPallas:
    def __init__(self, in_channels, out_channels, modes1, modes2, modes3, key):
        self.in_channels = in_channels
        self.out_channels = out_channels
        self.modes1, self.modes2, self.modes3 = modes1, modes2, modes3
        scale = 1.0 / (in_channels * out_channels)
        shape = (in_channels, out_channels, modes1, modes2, modes3)
        keys = jax.random.split(key, 8)

        def make_w(kr, ki):
            re = jax.random.uniform(kr, shape, dtype=jnp.float32)
            im = jax.random.uniform(ki, shape, dtype=jnp.float32)
            return (scale * jax.lax.complex(re, im)).astype(jnp.complex64)

        # weights1..weights4 (matches torch.rand cfloat semantics of the spec).
        self.weights = [make_w(keys[2 * i], keys[2 * i + 1]) for i in range(4)]

        # Precompute the packed / padded weight tensor once (static per layer):
        # (2, Cin, Cout, Mtot_padded) f32 with [0]=real, [1]=imag.
        M = modes1 * modes2 * modes3
        self._M = M
        self._Mtot = 4 * M
        self._pad = (-self._Mtot) % 128          # lane-dense padding
        Cin, Cout = in_channels, out_channels
        w_flat = jnp.concatenate(
            [w.reshape(Cin, Cout, M) for w in self.weights], axis=-1)
        if self._pad:
            w_flat = jnp.pad(w_flat, ((0, 0), (0, 0), (0, self._pad)))
        self.w_packed = jnp.stack(
            [jnp.real(w_flat), jnp.imag(w_flat)], axis=0).astype(jnp.float32)

    def __call__(self, x):
        B, Cin, D1, D2, D3 = x.shape
        m1, m2, m3 = self.modes1, self.modes2, self.modes3
        Cout = self.out_channels
        M, Mtot, pad = self._M, self._Mtot, self._pad

        x_ft = jnp.fft.rfftn(x, axes=(-3, -2, -1))   # (B,Cin,D1,D2,D3//2+1) c64

        corners = [
            x_ft[:, :, :m1, :m2, :m3],
            x_ft[:, :, D1 - m1:, :m2, :m3],
            x_ft[:, :, :m1, D2 - m2:, :m3],
            x_ft[:, :, D1 - m1:, D2 - m2:, :m3],
        ]
        # Fold corners + modes into one dense lane axis: (B, Cin, 4*M).
        x_flat = jnp.concatenate([c.reshape(B, Cin, M) for c in corners], axis=-1)
        if pad:
            x_flat = jnp.pad(x_flat, ((0, 0), (0, 0), (0, pad)))

        # (Cin, B, Mtot): contraction axis leading, then pack real/imag into a
        # single leading axis -> one DMA stream, cheap per-Cin slices in-kernel.
        x_cbm = jnp.transpose(x_flat, (1, 0, 2))
        x_packed = jnp.stack(
            [jnp.real(x_cbm), jnp.imag(x_cbm)], axis=0).astype(jnp.float32)

        out_packed = spectral_mul_pallas(x_packed, self.w_packed)  # (2,B,Cout,Mtot+pad)
        out_c = lax.complex(out_packed[0, :, :, :Mtot], out_packed[1, :, :, :Mtot])
        out_corners = out_c.reshape(B, Cout, 4, m1, m2, m3)

        # Scatter corners back; assignment order matches PyTorch (overlaps, if
        # 2*m > D, resolve identically).
        D3r = D3 // 2 + 1
        out_ft = jnp.zeros((B, Cout, D1, D2, D3r), dtype=jnp.complex64)
        out_ft = out_ft.at[:, :, :m1, :m2, :m3].set(out_corners[:, :, 0])
        out_ft = out_ft.at[:, :, D1 - m1:, :m2, :m3].set(out_corners[:, :, 1])
        out_ft = out_ft.at[:, :, :m1, D2 - m2:, :m3].set(out_corners[:, :, 2])
        out_ft = out_ft.at[:, :, D1 - m1:, D2 - m2:, :m3].set(out_corners[:, :, 3])

        return jnp.fft.irfftn(out_ft, s=(D1, D2, D3), axes=(-3, -2, -1))


def reference_forward(module, x):
    """Pure-JAX mirror of the PyTorch forward, for correctness checking."""
    B, Cin, D1, D2, D3 = x.shape
    m1, m2, m3 = module.modes1, module.modes2, module.modes3
    Cout = module.out_channels
    x_ft = jnp.fft.rfftn(x, axes=(-3, -2, -1))
    mul = lambda a, w: jnp.einsum('bixyz,ioxyz->boxyz', a, w)
    out_ft = jnp.zeros((B, Cout, D1, D2, D3 // 2 + 1), dtype=jnp.complex64)
    out_ft = out_ft.at[:, :, :m1, :m2, :m3].set(
        mul(x_ft[:, :, :m1, :m2, :m3], module.weights[0]))
    out_ft = out_ft.at[:, :, D1 - m1:, :m2, :m3].set(
        mul(x_ft[:, :, D1 - m1:, :m2, :m3], module.weights[1]))
    out_ft = out_ft.at[:, :, :m1, D2 - m2:, :m3].set(
        mul(x_ft[:, :, :m1, D2 - m2:, :m3], module.weights[2]))
    out_ft = out_ft.at[:, :, D1 - m1:, D2 - m2:, :m3].set(
        mul(x_ft[:, :, D1 - m1:, D2 - m2:, :m3], module.weights[3]))
    return jnp.fft.irfftn(out_ft, s=(D1, D2, D3), axes=(-3, -2, -1))


if __name__ == "__main__":
    key = jax.random.PRNGKey(0)
    k_x, k_w = jax.random.split(key)

    # Small shapes consistent with the module: B=2, Cin=4, Cout=4, 16^3 grid, 4 modes.
    B, Cin, Cout = 2, 4, 4
    D1 = D2 = D3 = 16
    m1 = m2 = m3 = 4

    x = jax.random.normal(k_x, (B, Cin, D1, D2, D3), dtype=jnp.float32)

    module = SpectralConv3dPallas(Cin, Cout, m1, m2, m3, k_w)

    out = jax.block_until_ready(module(x))
    ref = jax.block_until_ready(reference_forward(module, x))

    assert out.shape == (B, Cout, D1, D2, D3), out.shape
    np.testing.assert_allclose(np.asarray(out), np.asarray(ref), rtol=1e-4, atol=1e-4)

    print("KERNEL_OK")
</pallas_src>

<mosaic_0001>
module attributes {stable_mosaic.version = 11 : i64} {
  func.func @_spectral_mul_kernel(%arg0: i32, %arg1: i32, %arg2: memref<2x4x2x256xf32, #tpu.memory_space<vmem>>, %arg3: memref<2x4x4x256xf32, #tpu.memory_space<vmem>>, %arg4: memref<2x2x4x256xf32, #tpu.memory_space<vmem>>) attributes {dimension_semantics = [#tpu.dimension_semantics<parallel>, #tpu.dimension_semantics<parallel>], iteration_bounds = array<i64: 1, 1>, scalar_prefetch = 0 : i64, scratch_operands = 0 : i64, tpu.core_type = #tpu.core_type<tc>, window_params = [{transform_indices = @transform_0, window_bounds = array<i64: 2, 4, 2, 256>}, {transform_indices = @transform_1, window_bounds = array<i64: 2, 4, 4, 256>}, {transform_indices = @transform_2, window_bounds = array<i64: 2, 2, 4, 256>}]} {
    %cst = arith.constant 0.000000e+00 : f32
    %0 = vector.broadcast %cst : f32 to vector<2x4x256xf32>
    %cst_0 = arith.constant 0.000000e+00 : f32
    %1 = vector.broadcast %cst_0 : f32 to vector<2x4x256xf32>
    %c0 = arith.constant 0 : index
    %c0_1 = arith.constant 0 : index
    %c0_2 = arith.constant 0 : index
    %c0_3 = arith.constant 0 : index
    %2 = vector.load %arg2[%c0, %c0_1, %c0_2, %c0_3] : memref<2x4x2x256xf32, #tpu.memory_space<vmem>>, vector<1x1x2x256xf32>
    %3 = vector.shape_cast %2 : vector<1x1x2x256xf32> to vector<2x256xf32>
    %4 = vector.shape_cast %3 : vector<2x256xf32> to vector<2x1x256xf32>
    %c1 = arith.constant 1 : index
    %c0_4 = arith.constant 0 : index
    %c0_5 = arith.constant 0 : index
    %c0_6 = arith.constant 0 : index
    %5 = vector.load %arg2[%c1, %c0_4, %c0_5, %c0_6] : memref<2x4x2x256xf32, #tpu.memory_space<vmem>>, vector<1x1x2x256xf32>
    %6 = vector.shape_cast %5 : vector<1x1x2x256xf32> to vector<2x256xf32>
    %7 = vector.shape_cast %6 : vector<2x256xf32> to vector<2x1x256xf32>
    %c0_7 = arith.constant 0 : index
    %c0_8 = arith.constant 0 : index
    %c0_9 = arith.constant 0 : index
    %c0_10 = arith.constant 0 : index
    %8 = vector.load %arg3[%c0_7, %c0_8, %c0_9, %c0_10] : memref<2x4x4x256xf32, #tpu.memory_space<vmem>>, vector<1x1x4x256xf32>
    %9 = vector.shape_cast %8 : vector<1x1x4x256xf32> to vector<4x256xf32>
    %10 = vector.shape_cast %9 : vector<4x256xf32> to vector<1x4x256xf32>
    %c1_11 = arith.constant 1 : index
    %c0_12 = arith.constant 0 : index
    %c0_13 = arith.constant 0 : index
    %c0_14 = arith.constant 0 : index
    %11 = vector.load %arg3[%c1_11, %c0_12, %c0_13, %c0_14] : memref<2x4x4x256xf32, #tpu.memory_space<vmem>>, vector<1x1x4x256xf32>
    %12 = vector.shape_cast %11 : vector<1x1x4x256xf32> to vector<4x256xf32>
    %13 = vector.shape_cast %12 : vector<4x256xf32> to vector<1x4x256xf32>
    %14 = vector.broadcast %4 : vector<2x1x256xf32> to vector<2x4x256xf32>
    %15 = vector.broadcast %10 : vector<1x4x256xf32> to vector<2x4x256xf32>
    %16 = arith.mulf %14, %15 : vector<2x4x256xf32>
    %17 = vector.broadcast %7 : vector<2x1x256xf32> to vector<2x4x256xf32>
    %18 = vector.broadcast %13 : vector<1x4x256xf32> to vector<2x4x256xf32>
    %19 = arith.mulf %17, %18 : vector<2x4x256xf32>
    %20 = arith.subf %16, %19 : vector<2x4x256xf32>
    %21 = arith.addf %0, %20 : vector<2x4x256xf32>
    %22 = vector.broadcast %4 : vector<2x1x256xf32> to vector<2x4x256xf32>
    %23 = vector.broadcast %13 : vector<1x4x256xf32> to vector<2x4x256xf32>
    %24 = arith.mulf %22, %23 : vector<2x4x256xf32>
    %25 = vector.broadcast %7 : vector<2x1x256xf32> to vector<2x4x256xf32>
    %26 = vector.broadcast %10 : vector<1x4x256xf32> to vector<2x4x256xf32>
    %27 = arith.mulf %25, %26 : vector<2x4x256xf32>
    %28 = arith.addf %24, %27 : vector<2x4x256xf32>
    %29 = arith.addf %1, %28 : vector<2x4x256xf32>
    %c0_15 = arith.constant 0 : index
    %c1_16 = arith.constant 1 : index
    %c0_17 = arith.constant 0 : index
    %c0_18 = arith.constant 0 : index
    %30 = vector.load %arg2[%c0_15, %c1_16, %c0_17, %c0_18] : memref<2x4x2x256xf32, #tpu.memory_space<vmem>>, vector<1x1x2x256xf32>
    %31 = vector.shape_cast %30 : vector<1x1x2x256xf32> to vector<2x256xf32>
    %32 = vector.shape_cast %31 : vector<2x256xf32> to vector<2x1x256xf32>
    %c1_19 = arith.constant 1 : index
    %c1_20 = arith.constant 1 : index
    %c0_21 = arith.constant 0 : index
    %c0_22 = arith.constant 0 : index
    %33 = vector.load %arg2[%c1_19, %c1_20, %c0_21, %c0_22] : memref<2x4x2x256xf32, #tpu.memory_space<vmem>>, vector<1x1x2x256xf32>
    %34 = vector.shape_cast %33 : vector<1x1x2x256xf32> to vector<2x256xf32>
    %35 = vector.shape_cast %34 : vector<2x256xf32> to vector<2x1x256xf32>
    %c0_23 = arith.constant 0 : index
    %c1_24 = arith.constant 1 : index
    %c0_25 = arith.constant 0 : index
    %c0_26 = arith.constant 0 : index
    %36 = vector.load %arg3[%c0_23, %c1_24, %c0_25, %c0_26] : memref<2x4x4x256xf32, #tpu.memory_space<vmem>>, vector<1x1x4x256xf32>
    %37 = vector.shape_cast %36 : vector<1x1x4x256xf32> to vector<4x256xf32>
    %38 = vector.shape_cast %37 : vector<4x256xf32> to vector<1x4x256xf32>
    %c1_27 = arith.constant 1 : index
    %c1_28 = arith.constant 1 : index
    %c0_29 = arith.constant 0 : index
    %c0_30 = arith.constant 0 : index
    %39 = vector.load %arg3[%c1_27, %c1_28, %c0_29, %c0_30] : memref<2x4x4x256xf32, #tpu.memory_space<vmem>>, vector<1x1x4x256xf32>
    %40 = vector.shape_cast %39 : vector<1x1x4x256xf32> to vector<4x256xf32>
    %41 = vector.shape_cast %40 : vector<4x256xf32> to vector<1x4x256xf32>
    %42 = vector.broadcast %32 : vector<2x1x256xf32> to vector<2x4x256xf32>
    %43 = vector.broadcast %38 : vector<1x4x256xf32> to vector<2x4x256xf32>
    %44 = arith.mulf %42, %43 : vector<2x4x256xf32>
    %45 = vector.broadcast %35 : vector<2x1x256xf32> to vector<2x4x256xf32>
    %46 = vector.broadcast %41 : vector<1x4x256xf32> to vector<2x4x256xf32>
    %47 = arith.mulf %45, %46 : vector<2x4x256xf32>
    %48 = arith.subf %44, %47 : vector<2x4x256xf32>
    %49 = arith.addf %21, %48 : vector<2x4x256xf32>
    %50 = vector.broadcast %32 : vector<2x1x256xf32> to vector<2x4x256xf32>
    %51 = vector.broadcast %41 : vector<1x4x256xf32> to vector<2x4x256xf32>
    %52 = arith.mulf %50, %51 : vector<2x4x256xf32>
    %53 = vector.broadcast %35 : vector<2x1x256xf32> to vector<2x4x256xf32>
    %54 = vector.broadcast %38 : vector<1x4x256xf32> to vector<2x4x256xf32>
    %55 = arith.mulf %53, %54 : vector<2x4x256xf32>
    %56 = arith.addf %52, %55 : vector<2x4x256xf32>
    %57 = arith.addf %29, %56 : vector<2x4x256xf32>
    %c0_31 = arith.constant 0 : index
    %c2 = arith.constant 2 : index
    %c0_32 = arith.constant 0 : index
    %c0_33 = arith.constant 0 : index
    %58 = vector.load %arg2[%c0_31, %c2, %c0_32, %c0_33] : memref<2x4x2x256xf32, #tpu.memory_space<vmem>>, vector<1x1x2x256xf32>
    %59 = vector.shape_cast %58 : vector<1x1x2x256xf32> to vector<2x256xf32>
    %60 = vector.shape_cast %59 : vector<2x256xf32> to vector<2x1x256xf32>
    %c1_34 = arith.constant 1 : index
    %c2_35 = arith.constant 2 : index
    %c0_36 = arith.constant 0 : index
    %c0_37 = arith.constant 0 : index
    %61 = vector.load %arg2[%c1_34, %c2_35, %c0_36, %c0_37] : memref<2x4x2x256xf32, #tpu.memory_space<vmem>>, vector<1x1x2x256xf32>
    %62 = vector.shape_cast %61 : vector<1x1x2x256xf32> to vector<2x256xf32>
    %63 = vector.shape_cast %62 : vector<2x256xf32> to vector<2x1x256xf32>
    %c0_38 = arith.constant 0 : index
    %c2_39 = arith.constant 2 : index
    %c0_40 = arith.constant 0 : index
    %c0_41 = arith.constant 0 : index
    %64 = vector.load %arg3[%c0_38, %c2_39, %c0_40, %c0_41] : memref<2x4x4x256xf32, #tpu.memory_space<vmem>>, vector<1x1x4x256xf32>
    %65 = vector.shape_cast %64 : vector<1x1x4x256xf32> to vector<4x256xf32>
    %66 = vector.shape_cast %65 : vector<4x256xf32> to vector<1x4x256xf32>
    %c1_42 = arith.constant 1 : index
    %c2_43 = arith.constant 2 : index
    %c0_44 = arith.constant 0 : index
    %c0_45 = arith.constant 0 : index
    %67 = vector.load %arg3[%c1_42, %c2_43, %c0_44, %c0_45] : memref<2x4x4x256xf32, #tpu.memory_space<vmem>>, vector<1x1x4x256xf32>
    %68 = vector.shape_cast %67 : vector<1x1x4x256xf32> to vector<4x256xf32>
    %69 = vector.shape_cast %68 : vector<4x256xf32> to vector<1x4x256xf32>
    %70 = vector.broadcast %60 : vector<2x1x256xf32> to vector<2x4x256xf32>
    %71 = vector.broadcast %66 : vector<1x4x256xf32> to vector<2x4x256xf32>
    %72 = arith.mulf %70, %71 : vector<2x4x256xf32>
    %73 = vector.broadcast %63 : vector<2x1x256xf32> to vector<2x4x256xf32>
    %74 = vector.broadcast %69 : vector<1x4x256xf32> to vector<2x4x256xf32>
    %75 = arith.mulf %73, %74 : vector<2x4x256xf32>
    %76 = arith.subf %72, %75 : vector<2x4x256xf32>
    %77 = arith.addf %49, %76 : vector<2x4x256xf32>
    %78 = vector.broadcast %60 : vector<2x1x256xf32> to vector<2x4x256xf32>
    %79 = vector.broadcast %69 : vector<1x4x256xf32> to vector<2x4x256xf32>
    %80 = arith.mulf %78, %79 : vector<2x4x256xf32>
    %81 = vector.broadcast %63 : vector<2x1x256xf32> to vector<2x4x256xf32>
    %82 = vector.broadcast %66 : vector<1x4x256xf32> to vector<2x4x256xf32>
    %83 = arith.mulf %81, %82 : vector<2x4x256xf32>
    %84 = arith.addf %80, %83 : vector<2x4x256xf32>
    %85 = arith.addf %57, %84 : vector<2x4x256xf32>
    %c0_46 = arith.constant 0 : index
    %c3 = arith.constant 3 : index
    %c0_47 = arith.constant 0 : index
    %c0_48 = arith.constant 0 : index
    %86 = vector.load %arg2[%c0_46, %c3, %c0_47, %c0_48] : memref<2x4x2x256xf32, #tpu.memory_space<vmem>>, vector<1x1x2x256xf32>
    %87 = vector.shape_cast %86 : vector<1x1x2x256xf32> to vector<2x256xf32>
    %88 = vector.shape_cast %87 : vector<2x256xf32> to vector<2x1x256xf32>
    %c1_49 = arith.constant 1 : index
    %c3_50 = arith.constant 3 : index
    %c0_51 = arith.constant 0 : index
    %c0_52 = arith.constant 0 : index
    %89 = vector.load %arg2[%c1_49, %c3_50, %c0_51, %c0_52] : memref<2x4x2x256xf32, #tpu.memory_space<vmem>>, vector<1x1x2x256xf32>
    %90 = vector.shape_cast %89 : vector<1x1x2x256xf32> to vector<2x256xf32>
    %91 = vector.shape_cast %90 : vector<2x256xf32> to vector<2x1x256xf32>
    %c0_53 = arith.constant 0 : index
    %c3_54 = arith.constant 3 : index
    %c0_55 = arith.constant 0 : index
    %c0_56 = arith.constant 0 : index
    %92 = vector.load %arg3[%c0_53, %c3_54, %c0_55, %c0_56] : memref<2x4x4x256xf32, #tpu.memory_space<vmem>>, vector<1x1x4x256xf32>
    %93 = vector.shape_cast %92 : vector<1x1x4x256xf32> to vector<4x256xf32>
    %94 = vector.shape_cast %93 : vector<4x256xf32> to vector<1x4x256xf32>
    %c1_57 = arith.constant 1 : index
    %c3_58 = arith.constant 3 : index
    %c0_59 = arith.constant 0 : index
    %c0_60 = arith.constant 0 : index
    %95 = vector.load %arg3[%c1_57, %c3_58, %c0_59, %c0_60] : memref<2x4x4x256xf32, #tpu.memory_space<vmem>>, vector<1x1x4x256xf32>
    %96 = vector.shape_cast %95 : vector<1x1x4x256xf32> to vector<4x256xf32>
    %97 = vector.shape_cast %96 : vector<4x256xf32> to vector<1x4x256xf32>
    %98 = vector.broadcast %88 : vector<2x1x256xf32> to vector<2x4x256xf32>
    %99 = vector.broadcast %94 : vector<1x4x256xf32> to vector<2x4x256xf32>
    %100 = arith.mulf %98, %99 : vector<2x4x256xf32>
    %101 = vector.broadcast %91 : vector<2x1x256xf32> to vector<2x4x256xf32>
    %102 = vector.broadcast %97 : vector<1x4x256xf32> to vector<2x4x256xf32>
    %103 = arith.mulf %101, %102 : vector<2x4x256xf32>
    %104 = arith.subf %100, %103 : vector<2x4x256xf32>
    %105 = arith.addf %77, %104 : vector<2x4x256xf32>
    %106 = vector.broadcast %88 : vector<2x1x256xf32> to vector<2x4x256xf32>
    %107 = vector.broadcast %97 : vector<1x4x256xf32> to vector<2x4x256xf32>
    %108 = arith.mulf %106, %107 : vector<2x4x256xf32>
    %109 = vector.broadcast %91 : vector<2x1x256xf32> to vector<2x4x256xf32>
    %110 = vector.broadcast %94 : vector<1x4x256xf32> to vector<2x4x256xf32>
    %111 = arith.mulf %109, %110 : vector<2x4x256xf32>
    %112 = arith.addf %108, %111 : vector<2x4x256xf32>
    %113 = arith.addf %85, %112 : vector<2x4x256xf32>
    %c0_61 = arith.constant 0 : index
    %c0_62 = arith.constant 0 : index
    %c0_63 = arith.constant 0 : index
    %c0_64 = arith.constant 0 : index
    %114 = vector.load %arg4[%c0_61, %c0_62, %c0_63, %c0_64] : memref<2x2x4x256xf32, #tpu.memory_space<vmem>>, vector<1x2x4x256xf32>
    %115 = vector.shape_cast %114 : vector<1x2x4x256xf32> to vector<2x4x256xf32>
    %116 = vector.shape_cast %105 : vector<2x4x256xf32> to vector<1x2x4x256xf32>
    tpu.vector_store %arg4[%c0_61, %c0_62, %c0_63, %c0_64], %116 {strides = array<i32>} : memref<2x2x4x256xf32, #tpu.memory_space<vmem>>, vector<1x2x4x256xf32>,
    %c1_65 = arith.constant 1 : index
    %c0_66 = arith.constant 0 : index
    %c0_67 = arith.constant 0 : index
    %c0_68 = arith.constant 0 : index
    %117 = vector.load %arg4[%c1_65, %c0_66, %c0_67, %c0_68] : memref<2x2x4x256xf32, #tpu.memory_space<vmem>>, vector<1x2x4x256xf32>
    %118 = vector.shape_cast %117 : vector<1x2x4x256xf32> to vector<2x4x256xf32>
    %119 = vector.shape_cast %113 : vector<2x4x256xf32> to vector<1x2x4x256xf32>
    tpu.vector_store %arg4[%c1_65, %c0_66, %c0_67, %c0_68], %119 {strides = array<i32>} : memref<2x2x4x256xf32, #tpu.memory_space<vmem>>, vector<1x2x4x256xf32>,
    return
  }
  func.func @transform_0(%arg0: i32, %arg1: i32) -> (i32, i32, i32, i32) {
    %c0_i32 = arith.constant 0 : i32
    %c0_i32_0 = arith.constant 0 : i32
    %c0_i32_1 = arith.constant 0 : i32
    %c0_i32_2 = arith.constant 0 : i32
    return %c0_i32, %c0_i32_0, %c0_i32_1, %arg0 : i32, i32, i32, i32
  }
  func.func @transform_1(%arg0: i32, %arg1: i32) -> (i32, i32, i32, i32) {
    %c0_i32 = arith.constant 0 : i32
    %c0_i32_0 = arith.constant 0 : i32
    %c0_i32_1 = arith.constant 0 : i32
    return %c0_i32, %c0_i32_0, %arg1, %arg0 : i32, i32, i32, i32
  }
  func.func @transform_2(%arg0: i32, %arg1: i32) -> (i32, i32, i32, i32) {
    %c0_i32 = arith.constant 0 : i32
    %c0_i32_0 = arith.constant 0 : i32
    %c0_i32_1 = arith.constant 0 : i32
    return %c0_i32, %c0_i32_0, %arg1, %arg0 : i32, i32, i32, i32
  }
}

</mosaic_0001>

<llo_original>
// kernel: tpu_custom_call.1
$region0: #{tpu_custom_call.1}
  #allocation0 [shape = 'u32[]', space=smem, size = 0x4, offset = 0x4, fixed_abs, tag = 'smem constant byte address 0x4 - core index']
  #allocation1 [shape = 'u32[144,128]{1,0:T(1,128)}', space=vmem, size = 0x12000, scoped, tag = 'internal scratch']
  %s0 = inlined_call_operand.hbm [shape: f32[2,4,2,256], index: 0, kind: input, shape index: {}]
  %s1 = inlined_call_operand.hbm [shape: f32[2,4,4,256], index: 1, kind: input, shape index: {}]
  %s2 = inlined_call_operand.hbm [shape: f32[2,2,4,256], index: 2, kind: output, shape index: {}]
  %s3 = sld [smem:[#allocation0]]
  $region26: #{tpu_custom_call.1} parent=0
    _
  %s5 = ssub.s32 1, %s3
  %s6 = scalar_select 0, %s5, %s3
  $region1: #{tpu_custom_call.1} parent=0
    #allocation2 [shape = 'u8[16384]{0}', space=vmem, size = 0x4000, scoped, tag = 'input window, operand 0, single buffered']
    #allocation3 [shape = 's32[1]{0}', space=sflag, size = 0x4, scoped, tag = 'scoped memory for tpu_custom_call.1']
    #allocation4 [shape = 's32[1]{0}', space=sflag, size = 0x4, scoped, tag = 'scoped memory for tpu_custom_call.1']
    #allocation5 [shape = 'u8[32768]{0}', space=vmem, size = 0x8000, scoped, tag = 'input window, operand 1, single buffered']
    #allocation6 [shape = 's32[1]{0}', space=sflag, size = 0x4, scoped, tag = 'scoped memory for tpu_custom_call.1']
    #allocation7 [shape = 'u8[16384]{0}', space=vmem, size = 0x4000, scoped, tag = 'output window, operand 0, single buffered']
    %7 = vsyncpa [#allocation3], 0
    %8 = vsyncpa [#allocation6], 0
    %9 = vsyncpa [#allocation4], 0
    // Predicated region
    $region2: #{tpu_custom_call.1} parent=1 // pred_check
      _
    $region3: #{tpu_custom_call.1} parent=1 // pred_check_branch
      %11 = sbr.rel (0) target = $region5
    $region4: #{tpu_custom_call.1} parent=1 // pred_region
      %s13 = ssub.s32 512, 512
      %14 = vsyncadd [#allocation3], %s13
      %s15 = sshll.u32 [#allocation2], 4
      %s16 = int_to_ptr.vmem [resolvable:$true] %s15
      %21 = dma.hbm_to_vmem [thread:$0]  %s0, 512, %s16, [#allocation3], 64, 64, 4
    $region5: #{tpu_custom_call.1} parent=1 // pred_fallthru
      _
    // Predicated region
    $region6: #{tpu_custom_call.1} parent=1 // pred_check
      _
    $region7: #{tpu_custom_call.1} parent=1 // pred_check_branch
      %23 = sbr.rel (0) target = $region9
    $region8: #{tpu_custom_call.1} parent=1 // pred_region
      %s25 = ssub.s32 1024, 1024
      %26 = vsyncadd [#allocation6], %s25
      %s27 = sshll.u32 [#allocation5], 4
      %s28 = int_to_ptr.vmem [resolvable:$true] %s27
      %33 = dma.hbm_to_vmem [thread:$0]  %s1, 1024, %s28, [#allocation6], 128, 128, 8
    $region9: #{tpu_custom_call.1} parent=1 // pred_fallthru
      _
    // Predicated region
    $region10: #{tpu_custom_call.1} parent=1 // pred_check
      _
    $region11: #{tpu_custom_call.1} parent=1 // pred_check_branch
      %35 = sbr.rel (0) target = $region13
    $region12: #{tpu_custom_call.1} parent=1 // pred_region
      %36 = dma.done [#allocation3], 512
    $region13: #{tpu_custom_call.1} parent=1 // pred_fallthru
      _
    // Predicated region
    $region14: #{tpu_custom_call.1} parent=1 // pred_check
      _
    $region15: #{tpu_custom_call.1} parent=1 // pred_check_branch
      %38 = sbr.rel (0) target = $region17
    $region16: #{tpu_custom_call.1} parent=1 // pred_region
      %39 = dma.done [#allocation6], 1024
    $region17: #{tpu_custom_call.1} parent=1 // pred_fallthru
      _
    %v40 = vld [vmem:[#allocation2] sm:$0xf]
    %v43 = vunpack.c.l.s4 1966171168
    %v44 = vunpack.c.0.s8 %v43
    %v45 = vlaneseq
    %v46 = vshrl.u32 %v45, 7
    %v47 = vsub.s32 %v44, %v46
    %v48 = vrot.slane %v40, %v47
    %v49 = vcombine.high %v48, %v48
    %s50 = scalar_lea.vmem [#allocation2], 16
    %v51 = vld [vmem:[%s50] sm:$0xf]
    %v54 = vunpack.c.l.s4 1966171168
    %v55 = vunpack.c.0.s8 %v54
    %v56 = vlaneseq
    %v57 = vshrl.u32 %v56, 7
    %v58 = vsub.s32 %v55, %v57
    %v59 = vrot.slane %v51, %v58
    %v60 = vcombine.high %v59, %v59
    %v61 = vld [vmem:[#allocation5] sm:$0xff]
    %s62 = scalar_lea.vmem [#allocation5], 32
    %v63 = vld [vmem:[%s62] sm:$0xff]
    %v64 = vlaneseq
    %v65 = vshrl.u32 %v64, 7
    %v66 = vsub.s32 0, %v65
    %v67 = vrot.slane %v48, %v66
    %v68 = vlaneseq
    %v69 = vshrl.u32 %v68, 7
    %v70 = vsub.s32 1, %v69
    %v71 = vrot.slane %v48, %v70
    %v72 = vlaneseq
    %v73 = vshrl.u32 %v72, 7
    %v74 = vsub.s32 0, %v73
    %v75 = vrot.slane %v49, %v74
    %v76 = vlaneseq
    %v77 = vshrl.u32 %v76, 7
    %v78 = vsub.s32 1, %v77
    %v79 = vrot.slane %v49, %v78
    %v85 = vcombine.high %v61, %v61
    %v87 = vmul.f32 %v67, %v61
    %v88 = vmul.f32 %v71, %v85
    %v89 = vmul.f32 %v75, %v61
    %v90 = vmul.f32 %v79, %v85
    %v91 = vlaneseq
    %v92 = vshrl.u32 %v91, 7
    %v93 = vsub.s32 0, %v92
    %v94 = vrot.slane %v59, %v93
    %v95 = vlaneseq
    %v96 = vshrl.u32 %v95, 7
    %v97 = vsub.s32 1, %v96
    %v98 = vrot.slane %v59, %v97
    %v99 = vlaneseq
    %v100 = vshrl.u32 %v99, 7
    %v101 = vsub.s32 0, %v100
    %v102 = vrot.slane %v60, %v101
    %v103 = vlaneseq
    %v104 = vshrl.u32 %v103, 7
    %v105 = vsub.s32 1, %v104
    %v106 = vrot.slane %v60, %v105
    %v112 = vcombine.high %v63, %v63
    %v114 = vmul.f32 %v94, %v63
    %v115 = vmul.f32 %v98, %v112
    %v116 = vmul.f32 %v102, %v63
    %v117 = vmul.f32 %v106, %v112
    %v118 = vsub.f32 %v87, %v114
    %v119 = vsub.f32 %v88, %v115
    %v120 = vsub.f32 %v89, %v116
    %v121 = vsub.f32 %v90, %v117
    %v122 = vadd.f32 %v118, 0.0
    %v123 = vadd.f32 %v119, 0.0
    %v124 = vadd.f32 %v120, 0.0
    %v125 = vadd.f32 %v121, 0.0
    %v126 = vmul.f32 %v67, %v63
    %v127 = vmul.f32 %v71, %v112
    %v128 = vmul.f32 %v75, %v63
    %v129 = vmul.f32 %v79, %v112
    %v130 = vmul.f32 %v94, %v61
    %v131 = vmul.f32 %v98, %v85
    %v132 = vmul.f32 %v102, %v61
    %v133 = vmul.f32 %v106, %v85
    %v134 = vadd.f32 %v126, %v130
    %v135 = vadd.f32 %v127, %v131
    %v136 = vadd.f32 %v128, %v132
    %v137 = vadd.f32 %v129, %v133
    %v138 = vadd.f32 %v134, 0.0
    %v139 = vadd.f32 %v135, 0.0
    %v140 = vadd.f32 %v136, 0.0
    %v141 = vadd.f32 %v137, 0.0
    %s142 = scalar_lea.vmem [#allocation2], 4
    %v143 = vld [vmem:[%s142] sm:$0xf]
    %v146 = vunpack.c.l.s4 1966171168
    %v147 = vunpack.c.0.s8 %v146
    %v148 = vlaneseq
    %v149 = vshrl.u32 %v148, 7
    %v150 = vsub.s32 %v147, %v149
    %v151 = vrot.slane %v143, %v150
    %v152 = vcombine.high %v151, %v151
    %s153 = scalar_lea.vmem [#allocation2], 20
    %v154 = vld [vmem:[%s153] sm:$0xf]
    %v157 = vunpack.c.l.s4 1966171168
    %v158 = vunpack.c.0.s8 %v157
    %v159 = vlaneseq
    %v160 = vshrl.u32 %v159, 7
    %v161 = vsub.s32 %v158, %v160
    %v162 = vrot.slane %v154, %v161
    %v163 = vcombine.high %v162, %v162
    %s164 = scalar_lea.vmem [#allocation5], 8
    %v165 = vld [vmem:[%s164] sm:$0xff]
    %s166 = scalar_lea.vmem [#allocation5], 40
    %v167 = vld [vmem:[%s166] sm:$0xff]
    %v168 = vlaneseq
    %v169 = vshrl.u32 %v168, 7
    %v170 = vsub.s32 0, %v169
    %v171 = vrot.slane %v151, %v170
    %v172 = vlaneseq
    %v173 = vshrl.u32 %v172, 7
    %v174 = vsub.s32 1, %v173
    %v175 = vrot.slane %v151, %v174
    %v176 = vlaneseq
    %v177 = vshrl.u32 %v176, 7
    %v178 = vsub.s32 0, %v177
    %v179 = vrot.slane %v152, %v178
    %v180 = vlaneseq
    %v181 = vshrl.u32 %v180, 7
    %v182 = vsub.s32 1, %v181
    %v183 = vrot.slane %v152, %v182
    %v189 = vcombine.high %v165, %v165
    %v191 = vmul.f32 %v171, %v165
    %v192 = vmul.f32 %v175, %v189
    %v193 = vmul.f32 %v179, %v165
    %v194 = vmul.f32 %v183, %v189
    %v195 = vlaneseq
    %v196 = vshrl.u32 %v195, 7
    %v197 = vsub.s32 0, %v196
    %v198 = vrot.slane %v162, %v197
    %v199 = vlaneseq
    %v200 = vshrl.u32 %v199, 7
    %v201 = vsub.s32 1, %v200
    %v202 = vrot.slane %v162, %v201
    %v203 = vlaneseq
    %v204 = vshrl.u32 %v203, 7
    %v205 = vsub.s32 0, %v204
    %v206 = vrot.slane %v163, %v205
    %v207 = vlaneseq
    %v208 = vshrl.u32 %v207, 7
    %v209 = vsub.s32 1, %v208
    %v210 = vrot.slane %v163, %v209
    %v216 = vcombine.high %v167, %v167
    %v218 = vmul.f32 %v198, %v167
    %v219 = vmul.f32 %v202, %v216
    %v220 = vmul.f32 %v206, %v167
    %v221 = vmul.f32 %v210, %v216
    %v222 = vsub.f32 %v191, %v218
    %v223 = vsub.f32 %v192, %v219
    %v224 = vsub.f32 %v193, %v220
    %v225 = vsub.f32 %v194, %v221
    %v226 = vadd.f32 %v122, %v222
    %v227 = vadd.f32 %v123, %v223
    %v228 = vadd.f32 %v124, %v224
    %v229 = vadd.f32 %v125, %v225
    %v230 = vmul.f32 %v171, %v167
    %v231 = vmul.f32 %v175, %v216
    %v232 = vmul.f32 %v179, %v167
    %v233 = vmul.f32 %v183, %v216
    %v234 = vmul.f32 %v198, %v165
    %v235 = vmul.f32 %v202, %v189
    %v236 = vmul.f32 %v206, %v165
    %v237 = vmul.f32 %v210, %v189
    %v238 = vadd.f32 %v230, %v234
    %v239 = vadd.f32 %v231, %v235
    %v240 = vadd.f32 %v232, %v236
    %v241 = vadd.f32 %v233, %v237
    %v242 = vadd.f32 %v138, %v238
    %v243 = vadd.f32 %v139, %v239
    %v244 = vadd.f32 %v140, %v240
    %v245 = vadd.f32 %v141, %v241
    %s246 = scalar_lea.vmem [#allocation2], 8
    %v247 = vld [vmem:[%s246] sm:$0xf]
    %v250 = vunpack.c.l.s4 1966171168
    %v251 = vunpack.c.0.s8 %v250
    %v252 = vlaneseq
    %v253 = vshrl.u32 %v252, 7
    %v254 = vsub.s32 %v251, %v253
    %v255 = vrot.slane %v247, %v254
    %v256 = vcombine.high %v255, %v255
    %s257 = scalar_lea.vmem [#allocation2], 24
    %v258 = vld [vmem:[%s257] sm:$0xf]
    %v261 = vunpack.c.l.s4 1966171168
    %v262 = vunpack.c.0.s8 %v261
    %v263 = vlaneseq
    %v264 = vshrl.u32 %v263, 7
    %v265 = vsub.s32 %v262, %v264
    %v266 = vrot.slane %v258, %v265
    %v267 = vcombine.high %v266, %v266
    %s268 = scalar_lea.vmem [#allocation5], 16
    %v269 = vld [vmem:[%s268] sm:$0xff]
    %s270 = scalar_lea.vmem [#allocation5], 48
    %v271 = vld [vmem:[%s270] sm:$0xff]
    %v272 = vlaneseq
    %v273 = vshrl.u32 %v272, 7
    %v274 = vsub.s32 0, %v273
    %v275 = vrot.slane %v255, %v274
    %v276 = vlaneseq
    %v277 = vshrl.u32 %v276, 7
    %v278 = vsub.s32 1, %v277
    %v279 = vrot.slane %v255, %v278
    %v280 = vlaneseq
    %v281 = vshrl.u32 %v280, 7
    %v282 = vsub.s32 0, %v281
    %v283 = vrot.slane %v256, %v282
    %v284 = vlaneseq
    %v285 = vshrl.u32 %v284, 7
    %v286 = vsub.s32 1, %v285
    %v287 = vrot.slane %v256, %v286
    %v293 = vcombine.high %v269, %v269
    %v295 = vmul.f32 %v275, %v269
    %v296 = vmul.f32 %v279, %v293
    %v297 = vmul.f32 %v283, %v269
    %v298 = vmul.f32 %v287, %v293
    %v299 = vlaneseq
    %v300 = vshrl.u32 %v299, 7
    %v301 = vsub.s32 0, %v300
    %v302 = vrot.slane %v266, %v301
    %v303 = vlaneseq
    %v304 = vshrl.u32 %v303, 7
    %v305 = vsub.s32 1, %v304
    %v306 = vrot.slane %v266, %v305
    %v307 = vlaneseq
    %v308 = vshrl.u32 %v307, 7
    %v309 = vsub.s32 0, %v308
    %v310 = vrot.slane %v267, %v309
    %v311 = vlaneseq
    %v312 = vshrl.u32 %v311, 7
    %v313 = vsub.s32 1, %v312
    %v314 = vrot.slane %v267, %v313
    %v320 = vcombine.high %v271, %v271
    %v322 = vmul.f32 %v302, %v271
    %v323 = vmul.f32 %v306, %v320
    %v324 = vmul.f32 %v310, %v271
    %v325 = vmul.f32 %v314, %v320
    %v326 = vsub.f32 %v295, %v322
    %v327 = vsub.f32 %v296, %v323
    %v328 = vsub.f32 %v297, %v324
    %v329 = vsub.f32 %v298, %v325
    %v330 = vadd.f32 %v226, %v326
    %v331 = vadd.f32 %v227, %v327
    %v332 = vadd.f32 %v228, %v328
    %v333 = vadd.f32 %v229, %v329
    %v334 = vmul.f32 %v275, %v271
    %v335 = vmul.f32 %v279, %v320
    %v336 = vmul.f32 %v283, %v271
    %v337 = vmul.f32 %v287, %v320
    %v338 = vmul.f32 %v302, %v269
    %v339 = vmul.f32 %v306, %v293
    %v340 = vmul.f32 %v310, %v269
    %v341 = vmul.f32 %v314, %v293
    %v342 = vadd.f32 %v334, %v338
    %v343 = vadd.f32 %v335, %v339
    %v344 = vadd.f32 %v336, %v340
    %v345 = vadd.f32 %v337, %v341
    %v346 = vadd.f32 %v242, %v342
    %v347 = vadd.f32 %v243, %v343
    %v348 = vadd.f32 %v244, %v344
    %v349 = vadd.f32 %v245, %v345
    %s350 = scalar_lea.vmem [#allocation2], 12
    %v351 = vld [vmem:[%s350] sm:$0xf]
    %v354 = vunpack.c.l.s4 1966171168
    %v355 = vunpack.c.0.s8 %v354
    %v356 = vlaneseq
    %v357 = vshrl.u32 %v356, 7
    %v358 = vsub.s32 %v355, %v357
    %v359 = vrot.slane %v351, %v358
    %v360 = vcombine.high %v359, %v359
    %s361 = scalar_lea.vmem [#allocation2], 28
    %v362 = vld [vmem:[%s361] sm:$0xf]
    %v365 = vunpack.c.l.s4 1966171168
    %v366 = vunpack.c.0.s8 %v365
    %v367 = vlaneseq
    %v368 = vshrl.u32 %v367, 7
    %v369 = vsub.s32 %v366, %v368
    %v370 = vrot.slane %v362, %v369
    %v371 = vcombine.high %v370, %v370
    %s372 = scalar_lea.vmem [#allocation5], 24
    %v373 = vld [vmem:[%s372] sm:$0xff]
    %s374 = scalar_lea.vmem [#allocation5], 56
    %v375 = vld [vmem:[%s374] sm:$0xff]
    %v376 = vlaneseq
    %v377 = vshrl.u32 %v376, 7
    %v378 = vsub.s32 0, %v377
    %v379 = vrot.slane %v359, %v378
    %v380 = vlaneseq
    %v381 = vshrl.u32 %v380, 7
    %v382 = vsub.s32 1, %v381
    %v383 = vrot.slane %v359, %v382
    %v384 = vlaneseq
    %v385 = vshrl.u32 %v384, 7
    %v386 = vsub.s32 0, %v385
    %v387 = vrot.slane %v360, %v386
    %v388 = vlaneseq
    %v389 = vshrl.u32 %v388, 7
    %v390 = vsub.s32 1, %v389
    %v391 = vrot.slane %v360, %v390
    %v397 = vcombine.high %v373, %v373
    %v399 = vmul.f32 %v379, %v373
    %v400 = vmul.f32 %v383, %v397
    %v401 = vmul.f32 %v387, %v373
    %v402 = vmul.f32 %v391, %v397
    %v403 = vlaneseq
    %v404 = vshrl.u32 %v403, 7
    %v405 = vsub.s32 0, %v404
    %v406 = vrot.slane %v370, %v405
    %v407 = vlaneseq
    %v408 = vshrl.u32 %v407, 7
    %v409 = vsub.s32 1, %v408
    %v410 = vrot.slane %v370, %v409
    %v411 = vlaneseq
    %v412 = vshrl.u32 %v411, 7
    %v413 = vsub.s32 0, %v412
    %v414 = vrot.slane %v371, %v413
    %v415 = vlaneseq
    %v416 = vshrl.u32 %v415, 7
    %v417 = vsub.s32 1, %v416
    %v418 = vrot.slane %v371, %v417
    %v424 = vcombine.high %v375, %v375
    %v426 = vmul.f32 %v406, %v375
    %v427 = vmul.f32 %v410, %v424
    %v428 = vmul.f32 %v414, %v375
    %v429 = vmul.f32 %v418, %v424
    %v430 = vsub.f32 %v399, %v426
    %v431 = vsub.f32 %v400, %v427
    %v432 = vsub.f32 %v401, %v428
    %v433 = vsub.f32 %v402, %v429
    %v434 = vadd.f32 %v330, %v430
    %v435 = vadd.f32 %v331, %v431
    %v436 = vadd.f32 %v332, %v432
    %v437 = vadd.f32 %v333, %v433
    %v438 = vmul.f32 %v379, %v375
    %v439 = vmul.f32 %v383, %v424
    %v440 = vmul.f32 %v387, %v375
    %v441 = vmul.f32 %v391, %v424
    %v442 = vmul.f32 %v406, %v373
    %v443 = vmul.f32 %v410, %v397
    %v444 = vmul.f32 %v414, %v373
    %v445 = vmul.f32 %v418, %v397
    %v446 = vadd.f32 %v438, %v442
    %v447 = vadd.f32 %v439, %v443
    %v448 = vadd.f32 %v440, %v444
    %v449 = vadd.f32 %v441, %v445
    %v450 = vadd.f32 %v346, %v446
    %v451 = vadd.f32 %v347, %v447
    %v452 = vadd.f32 %v348, %v448
    %v453 = vadd.f32 %v349, %v449
    %v458 = vcombine.low %v434, %v435
    %v459 = vcombine.low %v436, %v437
    %462 = vst [vmem:[#allocation7] sm:$0xff] %v458
    %463 = vst [vmem:[#allocation7 + $0x8] sm:$0xff] %v459
    %v468 = vcombine.low %v450, %v451
    %v469 = vcombine.low %v452, %v453
    %s472 = scalar_lea.vmem [#allocation7], 16
    %473 = vst [vmem:[%s472] sm:$0xff] %v468
    %474 = vst [vmem:[%s472 + $0x8] sm:$0xff] %v469
    // Predicated region
    $region18: #{tpu_custom_call.1} parent=1 // pred_check
      _
    $region19: #{tpu_custom_call.1} parent=1 // pred_check_branch
      %476 = sbr.rel (0) target = $region21
    $region20: #{tpu_custom_call.1} parent=1 // pred_region
      %s478 = ssub.s32 512, 512
      %479 = vsyncadd [#allocation4], %s478
      %s480 = sshll.u32 [#allocation7], 4
      %s481 = int_to_ptr.vmem [resolvable:$true] %s480
      %486 = dma.vmem_to_hbm [thread:$0]  %s481, 512, %s2, [#allocation4], 128, 128, 8
    $region21: #{tpu_custom_call.1} parent=1 // pred_fallthru
      _
    // Predicated region
    $region22: #{tpu_custom_call.1} parent=1 // pred_check
      _
    $region23: #{tpu_custom_call.1} parent=1 // pred_check_branch
      %488 = sbr.rel (0) target = $region25
    $region24: #{tpu_custom_call.1} parent=1 // pred_region
      %489 = dma.done [#allocation4], 512
    $region25: #{tpu_custom_call.1} parent=1 // pred_fallthru
      _
    %490 = vsyncpa [#allocation3], 1
    %491 = vsyncpa [#allocation6], 1
    %492 = vsyncpa [#allocation4], 1

</llo_original>
